<compile_context>
chip_gen: v7x
topology: tpu7x:2x2x1
jax: 0.10.0
libtpu: 0.0.40
codegen_flags: <defaults>
</compile_context>

<pallas_src>
import functools

import jax
import jax.numpy as jnp
from jax.experimental import pallas as pl
from jax.experimental.pallas import tpu as pltpu


def _round_up(n, m):
    return -(-n // m) * m


# ----------------------------------------------------------------------------
# Fused Pallas kernel:  y = (x.bf16 @ W) + b
#   W / b are the host-folded (encoder -> btlnk -> rev_btlnk -> decoder) chain.
#   bf16 MXU matmul, f32 accumulation, bias add in f32.
# ----------------------------------------------------------------------------
def _stsae_fused_kernel(x_ref, w_ref, b_ref, o_ref):
    x = x_ref[...].astype(jnp.bfloat16)           # in-kernel cast: free-ish VPU op
    y = jnp.dot(x, w_ref[...], preferred_element_type=jnp.float32)
    o_ref[...] = (y + b_ref[...]).astype(o_ref.dtype)


def stsae_forward(x, folded, *, block_n=256, out_dtype=jnp.float32):
    """x: (N, V, C, T) float32 -> (N, V, C, T) out_dtype (same layout as the PyTorch module)."""
    N, V, C, T = x.shape
    D = V * C * T
    w, b = folded["w"], folded["b"]
    assert w.shape == (D, D) and b.shape == (1, D), (w.shape, b.shape)

    # Batch tile: as big as requested (amortizes ~0.35us per grid step), but keep the grid
    # length >= 2 whenever N allows so ("parallel",) can shard across v7x's 2 TensorCores.
    bn = min(block_n, max(16, _round_up(pl.cdiv(N, 2), 16)))
    n_pad = _round_up(N, bn)
    grid = (n_pad // bn,)

    # Free row-major view: x flattened in (v, c, t) order, matching W's row order.
    x_flat = x.reshape(N, D)                       # stays f32; cast happens in-kernel
    if n_pad != N:
        x_flat = jnp.pad(x_flat, ((0, n_pad - N), (0, 0)))   # zero rows; sliced off below

    out_itemsize = jnp.dtype(out_dtype).itemsize
    flops = 2 * n_pad * D * D
    bytes_accessed = (n_pad * D * 4          # x in (f32)
                      + w.size * 2 + b.size * 4
                      + n_pad * D * out_itemsize)

    # VMEM: double-buffered activation tiles (in f32 + out) + double-buffered weights/bias.
    vmem_need = 2 * bn * D * (4 + out_itemsize) + 2 * (w.size * 2 + b.size * 4)
    vmem_limit = int(min(64 * 1024 * 1024, max(2 * vmem_need, 4 * 1024 * 1024)))

    y_flat = pl.pallas_call(
        _stsae_fused_kernel,
        out_shape=jax.ShapeDtypeStruct((n_pad, D), out_dtype),
        grid=grid,
        in_specs=[
            pl.BlockSpec((bn, D), lambda i: (i, 0)),   # activations: tiled over batch
            pl.BlockSpec((D, D), lambda i: (0, 0)),    # fused weight, VMEM-resident
            pl.BlockSpec((1, D), lambda i: (0, 0)),    # fused bias
        ],
        out_specs=pl.BlockSpec((bn, D), lambda i: (i, 0)),
        compiler_params=pltpu.CompilerParams(
            dimension_semantics=("parallel",),         # batch tiles independent (2-TC on v7x)
            vmem_limit_bytes=vmem_limit,
        ),
        cost_estimate=pl.CostEstimate(
            flops=flops, transcendentals=0, bytes_accessed=bytes_accessed),
    )(x_flat, w, b)

    if n_pad != N:
        y_flat = y_flat[:N]
    # Free view: columns were produced in (v, c, t) order == final permute(0, 3, 1, 2).
    return y_flat.reshape(N, V, C, T)


# ----------------------------------------------------------------------------
# Parameters (PyTorch-style, unfused) and the host-side algebraic fold.
# ----------------------------------------------------------------------------
def init_stsae_params(key, c_in, h_dim, latent_dim, n_frames, n_joints):
    D = h_dim * n_frames * n_joints
    k = jax.random.split(key, 8)
    s = 0.02
    return {
        "w_enc":   s * jax.random.normal(k[0], (c_in, h_dim),   jnp.float32),
        "b_enc":   s * jax.random.normal(k[1], (1, h_dim),      jnp.float32),
        "w_btlnk": s * jax.random.normal(k[2], (D, latent_dim), jnp.float32),
        "b_btlnk": s * jax.random.normal(k[3], (1, latent_dim), jnp.float32),
        "w_rev":   s * jax.random.normal(k[4], (latent_dim, D), jnp.float32),
        "b_rev":   s * jax.random.normal(k[5], (1, D),          jnp.float32),
        "w_dec":   s * jax.random.normal(k[6], (h_dim, c_in),   jnp.float32),
        "b_dec":   s * jax.random.normal(k[7], (1, c_in),       jnp.float32),
    }


def fold_stsae_params(params, *, c_in, h_dim, latent_dim, n_frames, n_joints):
    """Fold the whole (still-linear) chain encoder -> btlnk -> rev_btlnk -> decoder into a
    single (D x D) weight + (D,) bias, baking every PyTorch permute/view ordering into the
    weight layout (one-time, host side, f32).  Exact while all layers are linear.
    TODO(synk): drop this fold when real nonlinear Encoder/Decoder stacks are substituted.
    """
    C, H, T, V, L = c_in, h_dim, n_frames, n_joints, latent_dim
    assert H == 32, "STSAE.decode hard-codes 32 decoder input channels"
    # btlnk rows are in (h, t, v) order (flatten of contiguous (N, H, T, V)).
    wb = params["w_btlnk"].reshape(H, T, V, L)
    # W1[(v,c,t), l] = sum_h w_enc[c,h] * w_btlnk[(h,t,v), l]   (rows match x's (v,c,t) flatten)
    w1 = jnp.einsum("ch,htvl->vctl", params["w_enc"], wb).reshape(V * C * T, L)
    b1 = jnp.einsum("h,htvl->l", params["b_enc"][0], wb) + params["b_btlnk"][0]
    # rev_btlnk columns are in (h, t, v) order (view(N, 32, T, V)).
    wr = params["w_rev"].reshape(L, H, T, V)
    # W2[l, (v,c,t)] = sum_h w_rev[l,(h,t,v)] * w_dec[h,c]   (cols match the final permute)
    w2 = jnp.einsum("lhtv,hc->lvct", wr, params["w_dec"]).reshape(L, V * C * T)
    b2 = (jnp.einsum("htv,hc->vct", params["b_rev"][0].reshape(H, T, V), params["w_dec"])
          + params["b_dec"][0][None, :, None]).reshape(V * C * T)
    # Full collapse (exact in f32): one matmul, one bias.
    w = w1 @ w2                                   # (V*C*T, V*C*T)
    b = b1 @ w2 + b2                              # (V*C*T,)
    return {
        "w": w.astype(jnp.bfloat16),
        "b": b.reshape(1, V * C * T).astype(jnp.float32),
    }


def stsae_reference(x, params, *, h_dim, n_frames, n_joints):
    """Pure-JAX f32 mirror of the (stand-in) module forward, for correctness checking."""
    N, V, C, T = x.shape
    xp = jnp.transpose(x, (0, 2, 3, 1))                                       # (N,C,T,V)
    h = jnp.einsum("nctv,ch->nhtv", xp, params["w_enc"]) \
        + params["b_enc"][0][None, :, None, None]                             # encoder 1x1
    z = h.reshape(N, -1) @ params["w_btlnk"] + params["b_btlnk"]              # btlnk
    d = (z @ params["w_rev"] + params["b_rev"]).reshape(N, h_dim, T, V)       # rev_btlnk
    y = jnp.einsum("nhtv,hc->nctv", d, params["w_dec"]) \
        + params["b_dec"][0][None, :, None, None]                             # decoder 1x1
    return jnp.transpose(y, (0, 3, 1, 2))                                     # (N,V,C,T)


if __name__ == "__main__":
    # Small, module-consistent shapes.  decode() hard-codes 32 decoder input channels,
    # so h_dim = 32; V*C*T = 128 keeps HBM I/O lane-dense.  batch=48 is deliberately
    # NOT a multiple of the chosen tile, exercising the pad-to-tile path and a 2-step
    # parallel batch grid (both TensorCores busy on v7x).
    N, c_in, h_dim, latent_dim, n_frames, n_joints = 48, 4, 32, 128, 8, 4

    key = jax.random.PRNGKey(0)
    key_x, key_p = jax.random.split(key)
    x = jax.random.normal(key_x, (N, n_joints, c_in, n_frames), jnp.float32)  # (N, V, C, T)
    params = init_stsae_params(key_p, c_in, h_dim, latent_dim, n_frames, n_joints)
    folded = fold_stsae_params(params, c_in=c_in, h_dim=h_dim, latent_dim=latent_dim,
                               n_frames=n_frames, n_joints=n_joints)

    fwd = jax.jit(functools.partial(stsae_forward, block_n=256, out_dtype=jnp.float32))
    out = jax.block_until_ready(fwd(x, folded))

    assert out.shape == x.shape and out.dtype == jnp.float32, (out.shape, out.dtype)

    ref = stsae_reference(x, params, h_dim=h_dim, n_frames=n_frames, n_joints=n_joints)
    max_err = float(jnp.max(jnp.abs(out - ref)))
    assert jnp.allclose(out, ref, atol=2e-3, rtol=2e-2), max_err

    print("KERNEL_OK")
</pallas_src>

<mosaic_0001>
module attributes {stable_mosaic.version = 11 : i64} {
  func.func @_stsae_fused_kernel(%arg0: i32, %arg1: memref<32x128xf32, #tpu.memory_space<vmem>>, %arg2: memref<128x128xbf16, #tpu.memory_space<vmem>>, %arg3: memref<1x128xf32, #tpu.memory_space<vmem>>, %arg4: memref<32x128xf32, #tpu.memory_space<vmem>>) attributes {dimension_semantics = [#tpu.dimension_semantics<parallel>], iteration_bounds = array<i64: 2>, scalar_prefetch = 0 : i64, scratch_operands = 0 : i64, tpu.core_type = #tpu.core_type<tc>, window_params = [{transform_indices = @transform_0, window_bounds = array<i64: 32, 128>}, {pipeline_mode = #tpu.pipeline_mode<synchronous>, transform_indices = @transform_1, window_bounds = array<i64: 128, 128>}, {pipeline_mode = #tpu.pipeline_mode<synchronous>, transform_indices = @transform_2, window_bounds = array<i64: 1, 128>}, {transform_indices = @transform_3, window_bounds = array<i64: 32, 128>}]} {
    %c0 = arith.constant 0 : index
    %c0_0 = arith.constant 0 : index
    %0 = vector.load %arg1[%c0, %c0_0] : memref<32x128xf32, #tpu.memory_space<vmem>>, vector<32x128xf32>
    %1 = arith.truncf %0 : vector<32x128xf32> to vector<32x128xbf16>
    %c0_1 = arith.constant 0 : index
    %c0_2 = arith.constant 0 : index
    %2 = vector.load %arg2[%c0_1, %c0_2] : memref<128x128xbf16, #tpu.memory_space<vmem>>, vector<128x128xbf16>
    %cst = arith.constant dense<0.000000e+00> : vector<32x128xf32>
    %3 = tpu.matmul %1, %2, %cst {dimension_numbers = #tpu.dot_dimension_numbers<[1], [0], [0], [1], [0, 0, 1, 1], [], []>} : vector<32x128xbf16>, vector<128x128xbf16>, vector<32x128xf32> -> vector<32x128xf32>
    %c0_3 = arith.constant 0 : index
    %c0_4 = arith.constant 0 : index
    %4 = vector.load %arg3[%c0_3, %c0_4] : memref<1x128xf32, #tpu.memory_space<vmem>>, vector<1x128xf32>
    %5 = vector.broadcast %4 : vector<1x128xf32> to vector<32x128xf32>
    %6 = arith.addf %3, %5 : vector<32x128xf32>
    %c0_5 = arith.constant 0 : index
    %c0_6 = arith.constant 0 : index
    %7 = vector.load %arg4[%c0_5, %c0_6] : memref<32x128xf32, #tpu.memory_space<vmem>>, vector<32x128xf32>
    tpu.vector_store %arg4[%c0_5, %c0_6], %6 {strides = array<i32>} : memref<32x128xf32, #tpu.memory_space<vmem>>, vector<32x128xf32>,
    return
  }
  func.func @transform_0(%arg0: i32) -> (i32, i32) {
    %c0_i32 = arith.constant 0 : i32
    %c0_i32_0 = arith.constant 0 : i32
    return %arg0, %c0_i32 : i32, i32
  }
  func.func @transform_1(%arg0: i32) -> (i32, i32) {
    %c0_i32 = arith.constant 0 : i32
    %c0_i32_0 = arith.constant 0 : i32
    %c0_i32_1 = arith.constant 0 : i32
    return %c0_i32, %c0_i32_0 : i32, i32
  }
  func.func @transform_2(%arg0: i32) -> (i32, i32) {
    %c0_i32 = arith.constant 0 : i32
    %c0_i32_0 = arith.constant 0 : i32
    %c0_i32_1 = arith.constant 0 : i32
    return %c0_i32, %c0_i32_0 : i32, i32
  }
  func.func @transform_3(%arg0: i32) -> (i32, i32) {
    %c0_i32 = arith.constant 0 : i32
    %c0_i32_0 = arith.constant 0 : i32
    return %arg0, %c0_i32 : i32, i32
  }
}

</mosaic_0001>

<llo_original>
// kernel: stsae_forward.1
$region0: #{stsae_forward.1}
  #allocation0 [shape = 'u32[]', space=smem, size = 0x4, offset = 0x4, fixed_abs, tag = 'smem constant byte address 0x4 - core index']
  #allocation1 [shape = 'u32[144,128]{1,0:T(1,128)}', space=vmem, size = 0x12000, scoped, tag = 'internal scratch']
  %s0 = inlined_call_operand.vmem [shape: f32[64,128], index: 0, kind: input, shape index: {}]
  %s1 = inlined_call_operand.vmem [shape: bf16[128,128], index: 1, kind: input, shape index: {}]
  %s2 = inlined_call_operand.vmem [shape: f32[1,128], index: 2, kind: input, shape index: {}]
  %s3 = inlined_call_operand.vmem [shape: f32[64,128], index: 3, kind: output, shape index: {}]
  %s4 = sld [smem:[#allocation0]]
  $region45: #{stsae_forward.1} parent=0
    _
  %s6 = ssub.s32 1, %s4
  %s7 = scalar_select 0, %s6, %s4
  loop: start=0, step=1, limit=4
  $region2: #{stsae_forward.1} parent=0 // loop_pre_header
    _
  $region3: #{stsae_forward.1} parent=0 // loop_header
    %s9 = sphi 0, %s13
    %p10 = scmp.ge.s32.totalorder %s9, 4
    %s19 = sphi 0, %s21
    %s22 = sphi 0, %s19
    %s23 = sphi 0, %s22
    %s39 = sphi 0, %s23
    %s43 = sphi 0, %s43
    %s45 = sphi 0, %s43
    %s46 = sphi 0, %s45
    %s60 = sphi 0, %s46
    %s64 = sphi 0, %s64
    %s66 = sphi 0, %s64
    %s67 = sphi 0, %s66
    %s81 = sphi 0, %s67
    %s87 = sphi 0, %s89
    %s90 = sphi 0, %s87
    %s91 = sphi 0, %s90
    %s107 = sphi 0, %s91
  $region4: #{stsae_forward.1} parent=0 // loop_header_branch
    %12 = sbr.rel (%p10) target = $region8
  $region5: #{stsae_forward.1} parent=0 // loop_body
    %s14 = ssub.s32 %s9, 1
    %s15 = ssub.s32 %s9, 2
    %s16 = sadd.s32 %s9, 1
    %s17 = ssub.s32 %s9, %s16
    %p18 = scmp.eq.s32.totalorder %s17, 0
    %s20 = sadd.s32 %s19, 1
    %s21 = scalar_select %p18, %s19, %s20
    %p24 = pneg %p18
    %p25 = scmp.eq.s32.totalorder %s9, 1
    %p26 = por %p24, %p25
    %p27 = scmp.ne.s32.totalorder %s19, %s22
    %p28 = scmp.eq.s32.totalorder %s9, 0
    %p29 = por %p27, %p28
    %p30 = scmp.ne.s32.totalorder %s19, %s22
    %p31 = scmp.eq.s32.totalorder %s14, 1
    %p32 = por %p30, %p31
    %p33 = scmp.ne.s32.totalorder %s22, %s23
    %p34 = scmp.eq.s32.totalorder %s14, 0
    %p35 = por %p33, %p34
    %p36 = scmp.ne.s32.totalorder %s22, %s23
    %p37 = scmp.eq.s32.totalorder %s15, 1
    %p38 = por %p36, %p37
    %p40 = scmp.ne.s32.totalorder %s23, %s39
    %p41 = scmp.eq.s32.totalorder %s15, 0
    %p42 = por %p40, %p41
    %s44 = sadd.s32 %s43, 1
    %p47 = scmp.eq.s32.totalorder %s9, 1
    %p48 = scmp.ne.s32.totalorder %s43, %s45
    %p49 = scmp.eq.s32.totalorder %s9, 0
    %p50 = por %p48, %p49
    %p51 = scmp.ne.s32.totalorder %s43, %s45
    %p52 = scmp.eq.s32.totalorder %s14, 1
    %p53 = por %p51, %p52
    %p54 = scmp.ne.s32.totalorder %s45, %s46
    %p55 = scmp.eq.s32.totalorder %s14, 0
    %p56 = por %p54, %p55
    %p57 = scmp.ne.s32.totalorder %s45, %s46
    %p58 = scmp.eq.s32.totalorder %s15, 1
    %p59 = por %p57, %p58
    %p61 = scmp.ne.s32.totalorder %s46, %s60
    %p62 = scmp.eq.s32.totalorder %s15, 0
    %p63 = por %p61, %p62
    %s65 = sadd.s32 %s64, 1
    %p68 = scmp.eq.s32.totalorder %s9, 1
    %p69 = scmp.ne.s32.totalorder %s64, %s66
    %p70 = scmp.eq.s32.totalorder %s9, 0
    %p71 = por %p69, %p70
    %p72 = scmp.ne.s32.totalorder %s64, %s66
    %p73 = scmp.eq.s32.totalorder %s14, 1
    %p74 = por %p72, %p73
    %p75 = scmp.ne.s32.totalorder %s66, %s67
    %p76 = scmp.eq.s32.totalorder %s14, 0
    %p77 = por %p75, %p76
    %p78 = scmp.ne.s32.totalorder %s66, %s67
    %p79 = scmp.eq.s32.totalorder %s15, 1
    %p80 = por %p78, %p79
    %p82 = scmp.ne.s32.totalorder %s67, %s81
    %p83 = scmp.eq.s32.totalorder %s15, 0
    %p84 = por %p82, %p83
    %s85 = ssub.s32 %s9, %s16
    %p86 = scmp.eq.s32.totalorder %s85, 0
    %s88 = sadd.s32 %s87, 1
    %s89 = scalar_select %p86, %s87, %s88
    %p92 = pneg %p86
    %p93 = scmp.eq.s32.totalorder %s9, 1
    %p94 = por %p92, %p93
    %p95 = scmp.ne.s32.totalorder %s87, %s90
    %p96 = scmp.eq.s32.totalorder %s9, 0
    %p97 = por %p95, %p96
    %p98 = scmp.ne.s32.totalorder %s87, %s90
    %p99 = scmp.eq.s32.totalorder %s14, 1
    %p100 = por %p98, %p99
    %p101 = scmp.ne.s32.totalorder %s90, %s91
    %p102 = scmp.eq.s32.totalorder %s14, 0
    %p103 = por %p101, %p102
    %p104 = scmp.ne.s32.totalorder %s90, %s91
    %p105 = scmp.eq.s32.totalorder %s15, 1
    %p106 = por %p104, %p105
    %p108 = scmp.ne.s32.totalorder %s91, %s107
    %p109 = scmp.eq.s32.totalorder %s15, 0
    %p110 = por %p108, %p109
    %p111 = scmp.le.s32.totalorder 1, %s9
    %p112 = scmp.lt.s32.totalorder %s9, 3
    %p113 = pnand %p111, %p112
    %p114 = pneg %p113
    // Predicated region
    $region9: #{stsae_forward.1} parent=5 // pred_check
      _
    $region10: #{stsae_forward.1} parent=5 // pred_check_branch
      %116 = sbr.rel (%p113) target = $region12
    $region11: #{stsae_forward.1} parent=5 // pred_region
      %s117 = ssub.s32 %s9, 1
      // Predicated region
      $region13: #{stsae_forward.1} parent=11 // pred_check
        %p118 = pneg %p56
      $region14: #{stsae_forward.1} parent=11 // pred_check_branch
        %120 = sbr.rel (%p118) target = $region16
      $region15: #{stsae_forward.1} parent=11 // pred_region
        _
      $region16: #{stsae_forward.1} parent=11 // pred_fallthru
        _
      // Predicated region
      $region17: #{stsae_forward.1} parent=11 // pred_check
        %p121 = pneg %p77
      $region18: #{stsae_forward.1} parent=11 // pred_check_branch
        %123 = sbr.rel (%p121) target = $region20
      $region19: #{stsae_forward.1} parent=11 // pred_region
        _
      $region20: #{stsae_forward.1} parent=11 // pred_fallthru
        _
    $region12: #{stsae_forward.1} parent=5 // pred_fallthru
      _
    %p124 = scmp.lt.s32.totalorder %s9, 2
    // Predicated region
    $region21: #{stsae_forward.1} parent=5 // pred_check
      %p125 = pneg %p124
    $region22: #{stsae_forward.1} parent=5 // pred_check_branch
      %127 = sbr.rel (%p125) target = $region24
    $region23: #{stsae_forward.1} parent=5 // pred_region
      // Predicated region
      $region25: #{stsae_forward.1} parent=23 // pred_check
        %p128 = pneg %p29
      $region26: #{stsae_forward.1} parent=23 // pred_check_branch
        %130 = sbr.rel (%p128) target = $region28
      $region27: #{stsae_forward.1} parent=23 // pred_region
        %s131 = smul.u32 4, %s9
        %p132 = scmp.lt.s32.totalorder %s131, 7
        %s133 = scalar_select %p132, %s131, 7
        %s134 = smul.addr %s133, 8
        %s135 = scalar_lea.vmem %s0, %s134
        %s136 = smul.u32 4, %s9
      $region28: #{stsae_forward.1} parent=23 // pred_fallthru
        _
    $region24: #{stsae_forward.1} parent=5 // pred_fallthru
      _
    %p137 = scmp.le.s32.totalorder 1, %s9
    %p138 = scmp.lt.s32.totalorder %s9, 3
    %p139 = pnand %p137, %p138
    %p140 = pneg %p139
    // Predicated region
    $region29: #{stsae_forward.1} parent=5 // pred_check
      _
    $region30: #{stsae_forward.1} parent=5 // pred_check_branch
      %142 = sbr.rel (%p139) target = $region32
    $region31: #{stsae_forward.1} parent=5 // pred_region
      %s143 = ssub.s32 %s9, 1
      %s144 = smul.u32 4, %s14
      %p145 = scmp.lt.s32.totalorder %s144, 7
      %s146 = scalar_select %p145, %s144, 7
      %s147 = smul.addr %s146, 8
      %s148 = scalar_lea.vmem %s0, %s147
      %p149 = pneg %p35
      %p150 = pneg %p32
      %p151 = pneg %p56
      %p152 = pneg %p53
      %p153 = pneg %p77
      %p154 = pneg %p74
      %p155 = pneg %p103
      %p156 = pneg %p100
      %s157 = smul.u32 4, %s14
      %p158 = scmp.lt.s32.totalorder %s157, 7
      %s159 = scalar_select %p158, %s157, 7
      %s160 = smul.addr %s159, 8
      %s161 = scalar_lea.vmem %s3, %s160
      %s162 = smul.u32 4, %s14
      %p163 = scmp.lt.s32.totalorder %s162, 7
      %s164 = scalar_select %p163, %s162, 7
      %s165 = smul.addr %s164, 8
      %s166 = scalar_lea.vmem %s0, %s165
      %s167 = smul.u32 4, %s14
      %s168 = smul.u32 4, %s14
      %p169 = scmp.lt.s32.totalorder %s168, 7
      %s170 = scalar_select %p169, %s168, 7
      %s171 = smul.addr %s170, 8
      %s172 = scalar_lea.vmem %s3, %s171
      %s173 = smul.u32 4, %s14
      %v175 = vld [vmem:[%s166] sm:$0xff]
      %v176 = vld [vmem:[%s166 + $0x8] sm:$0xff]
      %v177 = vld [vmem:[%s166 + $0x10] sm:$0xff]
      %v178 = vld [vmem:[%s166 + $0x18] sm:$0xff]
      %v179 = vpack.c.bf16 %v176, %v175
      %v180 = vpack.c.bf16 %v178, %v177
      %v181 = vld [vmem:[%s1] sm:$0xf]
      %v182 = vld [vmem:[%s1 + $0x4] sm:$0xf]
      %v183 = vld [vmem:[%s1 + $0x8] sm:$0xf]
      %v184 = vld [vmem:[%s1 + $0xc] sm:$0xf]
      %v185 = vld [vmem:[%s1 + $0x10] sm:$0xf]
      %v186 = vld [vmem:[%s1 + $0x14] sm:$0xf]
      %v187 = vld [vmem:[%s1 + $0x18] sm:$0xf]
      %v188 = vld [vmem:[%s1 + $0x1c] sm:$0xf]
      %v189 = vld [vmem:[%s1 + $0x20] sm:$0xf]
      %v190 = vld [vmem:[%s1 + $0x24] sm:$0xf]
      %v191 = vld [vmem:[%s1 + $0x28] sm:$0xf]
      %v192 = vld [vmem:[%s1 + $0x2c] sm:$0xf]
      %v193 = vld [vmem:[%s1 + $0x30] sm:$0xf]
      %v194 = vld [vmem:[%s1 + $0x34] sm:$0xf]
      %v195 = vld [vmem:[%s1 + $0x38] sm:$0xf]
      %v196 = vld [vmem:[%s1 + $0x3c] sm:$0xf]
      %v197 = vld [vmem:[%s2] sm:$0x1]
      %v199 = vlaneseq
      %v200 = vshrl.u32 %v199, 7
      %v201 = vsub.s32 0, %v200
      %v202 = vrot.slane %v197, %v201
      %v220 = vunpack.c.l.b16 %v181
      %v221 = vunpack.c.l.b16 %v182
      %v222 = vunpack.c.l.b16 %v183
      %v223 = vunpack.c.l.b16 %v184
      %v224 = vunpack.c.l.b16 %v185
      %v225 = vunpack.c.l.b16 %v186
      %v226 = vunpack.c.l.b16 %v187
      %v227 = vunpack.c.l.b16 %v188
      %v228 = vunpack.c.l.b16 %v189
      %v229 = vunpack.c.l.b16 %v190
      %v230 = vunpack.c.l.b16 %v191
      %v231 = vunpack.c.l.b16 %v192
      %v232 = vunpack.c.l.b16 %v193
      %v233 = vunpack.c.l.b16 %v194
      %v234 = vunpack.c.l.b16 %v195
      %v235 = vunpack.c.l.b16 %v196
      %v236 = vpack.c.b16 %v221, %v220
      %v237 = vpack.c.b16 %v223, %v222
      %v238 = vpack.c.b16 %v225, %v224
      %v239 = vpack.c.b16 %v227, %v226
      %v240 = vpack.c.b16 %v229, %v228
      %v241 = vpack.c.b16 %v231, %v230
      %v242 = vpack.c.b16 %v233, %v232
      %v243 = vpack.c.b16 %v235, %v234
      %252 = vmatprep.subr.bf16.mxu0 0
      %253 = vmatpush1.bf16.msra.mxu0 %v236
      %254 = vmatprep.subr.bf16.mxu0 0
      %255 = vmatpush1.bf16.msra.mxu0 %v237
      %256 = vmatprep.subr.bf16.mxu0 0
      %257 = vmatpush1.bf16.msra.mxu0 %v238
      %258 = vmatprep.subr.bf16.mxu0 0
      %259 = vmatpush1.bf16.msra.mxu0 %v239
      %260 = vmatprep.subr.bf16.mxu0 0
      %261 = vmatpush1.bf16.msra.mxu0 %v240
      %262 = vmatprep.subr.bf16.mxu0 0
      %263 = vmatpush1.bf16.msra.mxu0 %v241
      %264 = vmatprep.subr.bf16.mxu0 0
      %265 = vmatpush1.bf16.msra.mxu0 %v242
      %266 = vmatprep.subr.bf16.mxu0 0
      %267 = vmatpush1.bf16.msra.mxu0 %v243
      %268 = vmatprep.subr.bf16.mxu0 0
      %269 = vmatpush1.bf16.msra.mxu0 0
      %270 = vmatprep.subr.bf16.mxu0 0
      %271 = vmatpush1.bf16.msra.mxu0 0
      %272 = vmatprep.subr.bf16.mxu0 0
      %273 = vmatpush1.bf16.msra.mxu0 0
      %274 = vmatprep.subr.bf16.mxu0 0
      %275 = vmatpush1.bf16.msra.mxu0 0
      %276 = vmatprep.subr.bf16.mxu0 0
      %277 = vmatpush1.bf16.msra.mxu0 0
      %278 = vmatprep.subr.bf16.mxu0 0
      %279 = vmatpush1.bf16.msra.mxu0 0
      %280 = vmatprep.subr.bf16.mxu0 0
      %281 = vmatpush1.bf16.msra.mxu0 0
      %282 = vmatprep.subr.bf16.mxu0 0
      %283 = vmatpush1.bf16.msra.mxu0 0
      %284 = vmatprep.mubr.bf16.mxu0 0
      %285 = vmatmul.mubr.bf16.gmra.mrb[0].mxu0 %v179
      %v286 = vpop.f32.mrb[0].mxu0
      %v287 = vadd.f32 %v202, %v286
      %v288 = vpop.f32.mrb[0].mxu0
      %v289 = vpop.f32.mrb[0].mxu0
      %v290 = vadd.f32 %v202, %v289
      %v291 = vpop.f32.mrb[0].mxu0
      %292 = vmatprep.mubr.bf16.mxu0 0
      %293 = vmatmul.mubr.bf16.gmra.mrb[0].mxu0 %v180
      %v294 = vpop.f32.mrb[0].mxu0
      %v295 = vadd.f32 %v202, %v294
      %v296 = vpop.f32.mrb[0].mxu0
      %v297 = vpop.f32.mrb[0].mxu0
      %v298 = vadd.f32 %v202, %v297
      %v299 = vpop.f32.mrb[0].mxu0
      %300 = vdwg.mxu0
      %301 = vst [vmem:[%s172] sm:$0xff] %v287
      %302 = vst [vmem:[%s172 + $0x8] sm:$0xff] %v290
      %303 = vst [vmem:[%s172 + $0x10] sm:$0xff] %v295
      %304 = vst [vmem:[%s172 + $0x18] sm:$0xff] %v298
      %s305 = smul.u32 4, %s14
      %p306 = scmp.lt.s32.totalorder %s305, 7
      %s307 = scalar_select %p306, %s305, 7
      %s308 = smul.addr %s307, 8
      %s309 = scalar_lea.vmem %s3, %s308
      // Predicated region
      $region33: #{stsae_forward.1} parent=31 // pred_check
        %p310 = pneg %p100
      $region34: #{stsae_forward.1} parent=31 // pred_check_branch
        %312 = sbr.rel (%p310) target = $region36
      $region35: #{stsae_forward.1} parent=31 // pred_region
        %s313 = smul.u32 4, %s14
      $region36: #{stsae_forward.1} parent=31 // pred_fallthru
        _
    $region32: #{stsae_forward.1} parent=5 // pred_fallthru
      _
    %p314 = scmp.le.s32.totalorder 2, %s9
    // Predicated region
    $region37: #{stsae_forward.1} parent=5 // pred_check
      %p315 = pneg %p314
    $region38: #{stsae_forward.1} parent=5 // pred_check_branch
      %317 = sbr.rel (%p315) target = $region40
    $region39: #{stsae_forward.1} parent=5 // pred_region
      %s318 = ssub.s32 %s9, 2
      // Predicated region
      $region41: #{stsae_forward.1} parent=39 // pred_check
        %p319 = pneg %p106
      $region42: #{stsae_forward.1} parent=39 // pred_check_branch
        %321 = sbr.rel (%p319) target = $region44
      $region43: #{stsae_forward.1} parent=39 // pred_region
        %s322 = smul.u32 4, %s15
        %p323 = scmp.lt.s32.totalorder %s322, 7
        %s324 = scalar_select %p323, %s322, 7
        %s325 = smul.addr %s324, 8
        %s326 = scalar_lea.vmem %s3, %s325
      $region44: #{stsae_forward.1} parent=39 // pred_fallthru
        _
    $region40: #{stsae_forward.1} parent=5 // pred_fallthru
      _
  $region6: #{stsae_forward.1} parent=0 // loop_footer
    %s13 = sadd.s32 1, %s9
  $region7: #{stsae_forward.1} parent=0 // loop_footer_branch
    %8 = sbr.rel target = $region3
  $region8: #{stsae_forward.1} parent=0 // loop_exit
    _

</llo_original>
